<compile_context>
chip_gen: v7x
topology: tpu7x:2x2x1
jax: 0.10.0
libtpu: 0.0.40
codegen_flags: <defaults>
</compile_context>

<pallas_src>
import functools

import jax
import jax.numpy as jnp
from jax.experimental import pallas as pl
from jax.experimental.pallas import tpu as pltpu

_BN_EPS = 1e-5


def _dense_block_kernel(x_ref, w_ref, p_ref, o_ref, h_ref):
    # x_ref: (B, IN)   full batch, bf16, resident across grid steps
    # w_ref: (IN, TN)  bf16 column tile of the pre-transposed weight
    # p_ref: (3, TN)   f32 packed [bias; gamma; beta]
    # o_ref: (B, TN)   output tile (lane-dense along out_features)
    # h_ref: (B, TN)   f32 VMEM scratch for post-ReLU activations
    p = p_ref[...]
    bias = p[0:1, :]
    gamma = p[1:2, :]
    beta = p[2:3, :]

    # Linear (MXU, bf16 operands, f32 accumulate) + bias, then ReLU (VPU).
    h_ref[...] = jnp.maximum(
        jnp.dot(x_ref[...], w_ref[...], preferred_element_type=jnp.float32) + bias,
        0.0,
    )
    h = h_ref[...]

    # BatchNorm1d training mode: biased per-feature batch statistics, one pass.
    inv_b = 1.0 / h.shape[0]
    mean = jnp.sum(h, axis=0, keepdims=True) * inv_b            # (1, TN)
    ex2 = jnp.sum(h * h, axis=0, keepdims=True) * inv_b         # (1, TN)
    var = jnp.maximum(ex2 - mean * mean, 0.0)                   # (1, TN)
    scale = gamma * jax.lax.rsqrt(var + _BN_EPS)                 # (1, TN)
    shift = beta - mean * scale                                  # (1, TN)
    o_ref[...] = (h * scale + shift).astype(o_ref.dtype)


def prepare_params(weight, bias, gamma, beta, *, weight_dtype=jnp.bfloat16):
    """One-time parameter prep, outside the per-call jitted path.

    weight: (out_features, in_features)  (PyTorch nn.Linear layout)
    Returns:
      w_t:    (in_features, out_features) in weight_dtype (bf16 by default)
      params: (3, out_features) f32 rows = [bias, gamma, beta]
    """
    w_t = jnp.asarray(weight).T.astype(weight_dtype)
    packed = jnp.stack(
        [jnp.asarray(bias), jnp.asarray(gamma), jnp.asarray(beta)], axis=0
    ).astype(jnp.float32)
    return w_t, packed


def _vmem_capacity_bytes():
    try:
        info = pltpu.get_tpu_info()
        return int(getattr(info, "vmem_capacity_bytes", 64 << 20))
    except Exception:
        return 64 << 20  # conservative (v7x per-TC)


def _vmem_need(B, in_features, tile_n):
    return (
        B * in_features * 2          # resident bf16 x (constant index_map, 1 buffer)
        + 2 * in_features * tile_n * 2   # double-buffered bf16 weight tile
        + 2 * 3 * tile_n * 4             # double-buffered packed params
        + 2 * B * tile_n * 4             # double-buffered f32 output tile
        + B * tile_n * 4                 # f32 h scratch
    )


def _pick_tile_n(n_padded, B, in_features, vmem_cap):
    """n_padded is either <= 128 (full block) or a multiple of 128."""
    if n_padded <= 128:
        return n_padded
    budget = int(0.6 * vmem_cap)
    # Prefer 256-multiples (full MXU passes on v6e/v7x); 384 intentionally
    # excluded.  Require grid_n >= 2 so the weight DMA pipelines and the
    # "parallel" grid axis can shard across v7x's two TensorCores.
    for cand in (2048, 1024, 512, 256, 128):
        if n_padded % cand:
            continue
        if n_padded // cand < 2:
            continue
        if _vmem_need(B, in_features, cand) > budget:
            continue
        return cand
    return 128


@functools.partial(jax.jit, static_argnames=("tile_n",))
def dense_vanilla_block(x, w_t, params, *, tile_n=None):
    """x: (B, in) f32; w_t: (in, out) pre-transposed bf16; params: (3, out) f32."""
    B, in_features = x.shape
    out_features = w_t.shape[1]

    # Pad out_features to a lane-aligned multiple of 128 when needed.  Padded
    # columns have zero weight/bias/gamma/beta -> normalize to exactly 0 and
    # are sliced off below; they do not affect real columns (BN is per-feature).
    if out_features > 128 and out_features % 128 != 0:
        pad = (-out_features) % 128
        w_t = jnp.pad(w_t, ((0, 0), (0, pad)))
        params = jnp.pad(params, ((0, 0), (0, pad)))
        n_padded = out_features + pad
    else:
        n_padded = out_features

    vmem_cap = _vmem_capacity_bytes()
    if tile_n is None:
        tile_n = _pick_tile_n(n_padded, B, in_features, vmem_cap)
    assert n_padded % tile_n == 0
    grid_n = n_padded // tile_n

    # Halve the x HBM stream + avoid the per-step in-kernel cast.
    x_bf = x.astype(jnp.bfloat16)

    vmem_need = _vmem_need(B, in_features, tile_n)
    vmem_limit = int(min(max(2 * vmem_need + (4 << 20), 16 << 20),
                         int(0.75 * vmem_cap)))

    cost = pl.CostEstimate(
        flops=2 * B * in_features * n_padded,
        transcendentals=n_padded,              # rsqrt per output feature
        bytes_accessed=(
            B * in_features * 2                # bf16 x
            + in_features * n_padded * 2       # bf16 weights
            + 3 * n_padded * 4                 # packed params
            + B * n_padded * 4                 # f32 output
        ),
    )

    out = pl.pallas_call(
        _dense_block_kernel,
        out_shape=jax.ShapeDtypeStruct((B, n_padded), x.dtype),
        grid_spec=pltpu.PrefetchScalarGridSpec(
            num_scalar_prefetch=0,
            grid=(grid_n,),
            in_specs=[
                # x: same block for every grid step (full batch, full K).
                pl.BlockSpec((B, in_features), lambda j: (0, 0)),
                # weight column tile (lane-dense along out_features).
                pl.BlockSpec((in_features, tile_n), lambda j: (0, j)),
                # packed [bias; gamma; beta] tile.
                pl.BlockSpec((3, tile_n), lambda j: (0, j)),
            ],
            out_specs=pl.BlockSpec((B, tile_n), lambda j: (0, j)),
            scratch_shapes=[pltpu.VMEM((B, tile_n), jnp.float32)],
        ),
        compiler_params=pltpu.CompilerParams(
            dimension_semantics=("parallel",),
            vmem_limit_bytes=vmem_limit,
        ),
        cost_estimate=cost,
    )(x_bf, w_t, params)

    if n_padded != out_features:
        out = out[:, :out_features]
    return out


def _reference(x, weight, bias, gamma, beta):
    h = x @ weight.T + bias
    h = jnp.maximum(h, 0.0)
    mean = jnp.mean(h, axis=0, keepdims=True)
    var = jnp.mean((h - mean) ** 2, axis=0, keepdims=True)
    return (h - mean) / jnp.sqrt(var + _BN_EPS) * gamma + beta


if __name__ == "__main__":
    key = jax.random.PRNGKey(0)
    k_x, k_w, k_b = jax.random.split(key, 3)

    batch = 8
    in_features = 32
    out_features = 256   # -> tile_n=128, grid_n=2 (pipelined / megacore-shardable)

    # Deterministic "parameter init" mirroring the PyTorch module:
    #  - weight: kaiming_normal_(nonlinearity='relu') -> N(0, sqrt(2/fan_in))
    #  - bias:   Linear default U(-1/sqrt(fan_in), 1/sqrt(fan_in))
    #  - batch-norm: gamma=1, beta=0
    w_std = (2.0 / in_features) ** 0.5
    weight = w_std * jax.random.normal(k_w, (out_features, in_features), jnp.float32)
    bound = 1.0 / (in_features ** 0.5)
    bias = jax.random.uniform(k_b, (out_features,), jnp.float32, -bound, bound)
    gamma = jnp.ones((out_features,), jnp.float32)
    beta = jnp.zeros((out_features,), jnp.float32)

    x = jax.random.normal(k_x, (batch, in_features), jnp.float32)

    # One-time prep (transpose + bf16 cast + packing) outside the jitted call.
    w_t, params = prepare_params(weight, bias, gamma, beta)

    out = dense_vanilla_block(x, w_t, params)
    out = jax.block_until_ready(out)

    ref = _reference(x, weight, bias, gamma, beta)
    assert out.shape == (batch, out_features)
    # bf16 MXU matmul (f32 accumulation) vs f32 reference -> loosened tolerance.
    assert jnp.allclose(out, ref, atol=5e-2, rtol=5e-2), "mismatch vs reference"

    print("KERNEL_OK")
</pallas_src>

<mosaic_0001>
module attributes {stable_mosaic.version = 11 : i64} {
  func.func @_dense_block_kernel(%arg0: i32, %arg1: memref<8x32xbf16, #tpu.memory_space<vmem>>, %arg2: memref<32x128xbf16, #tpu.memory_space<vmem>>, %arg3: memref<3x128xf32, #tpu.memory_space<vmem>>, %arg4: memref<8x128xf32, #tpu.memory_space<vmem>>, %arg5: memref<8x128xf32, #tpu.memory_space<vmem>>) attributes {dimension_semantics = [#tpu.dimension_semantics<parallel>], iteration_bounds = array<i64: 2>, scalar_prefetch = 0 : i64, scratch_operands = 1 : i64, tpu.core_type = #tpu.core_type<tc>, window_params = [{pipeline_mode = #tpu.pipeline_mode<synchronous>, transform_indices = @transform_0, window_bounds = array<i64: 8, 32>}, {transform_indices = @transform_1, window_bounds = array<i64: 32, 128>}, {transform_indices = @transform_2, window_bounds = array<i64: 3, 128>}, {transform_indices = @transform_3, window_bounds = array<i64: 8, 128>}]} {
    %c0 = arith.constant 0 : index
    %c0_0 = arith.constant 0 : index
    %0 = vector.load %arg3[%c0, %c0_0] : memref<3x128xf32, #tpu.memory_space<vmem>>, vector<3x128xf32>
    %1 = vector.extract_strided_slice %0 {offsets = [0, 0], sizes = [1, 128], strides = [1, 1]} : vector<3x128xf32> to vector<1x128xf32>
    %2 = vector.extract_strided_slice %0 {offsets = [1, 0], sizes = [1, 128], strides = [1, 1]} : vector<3x128xf32> to vector<1x128xf32>
    %3 = vector.extract_strided_slice %0 {offsets = [2, 0], sizes = [1, 128], strides = [1, 1]} : vector<3x128xf32> to vector<1x128xf32>
    %c0_1 = arith.constant 0 : index
    %c0_2 = arith.constant 0 : index
    %4 = vector.load %arg1[%c0_1, %c0_2] : memref<8x32xbf16, #tpu.memory_space<vmem>>, vector<8x32xbf16>
    %c0_3 = arith.constant 0 : index
    %c0_4 = arith.constant 0 : index
    %5 = vector.load %arg2[%c0_3, %c0_4] : memref<32x128xbf16, #tpu.memory_space<vmem>>, vector<32x128xbf16>
    %cst = arith.constant dense<0.000000e+00> : vector<8x128xf32>
    %6 = tpu.matmul %4, %5, %cst {dimension_numbers = #tpu.dot_dimension_numbers<[1], [0], [0], [1], [0, 0, 1, 1], [], []>} : vector<8x32xbf16>, vector<32x128xbf16>, vector<8x128xf32> -> vector<8x128xf32>
    %7 = vector.broadcast %1 : vector<1x128xf32> to vector<8x128xf32>
    %8 = arith.addf %6, %7 : vector<8x128xf32>
    %cst_5 = arith.constant 0.000000e+00 : f32
    %9 = vector.broadcast %cst_5 : f32 to vector<8x128xf32>
    %10 = arith.maximumf %8, %9 : vector<8x128xf32>
    %c0_6 = arith.constant 0 : index
    %c0_7 = arith.constant 0 : index
    %11 = vector.load %arg5[%c0_6, %c0_7] : memref<8x128xf32, #tpu.memory_space<vmem>>, vector<8x128xf32>
    tpu.vector_store %arg5[%c0_6, %c0_7], %10 {strides = array<i32>} : memref<8x128xf32, #tpu.memory_space<vmem>>, vector<8x128xf32>,
    %c0_8 = arith.constant 0 : index
    %c0_9 = arith.constant 0 : index
    %12 = vector.load %arg5[%c0_8, %c0_9] : memref<8x128xf32, #tpu.memory_space<vmem>>, vector<8x128xf32>
    %cst_10 = arith.constant dense<0.000000e+00> : vector<128xf32>
    %13 = vector.multi_reduction <add>, %12, %cst_10 [0] : vector<8x128xf32> to vector<128xf32>
    %14 = vector.shape_cast %13 : vector<128xf32> to vector<1x128xf32>
    %cst_11 = arith.constant 1.250000e-01 : f32
    %15 = vector.broadcast %cst_11 : f32 to vector<1x128xf32>
    %16 = arith.mulf %14, %15 : vector<1x128xf32>
    %17 = arith.mulf %12, %12 : vector<8x128xf32>
    %cst_12 = arith.constant dense<0.000000e+00> : vector<128xf32>
    %18 = vector.multi_reduction <add>, %17, %cst_12 [0] : vector<8x128xf32> to vector<128xf32>
    %19 = vector.shape_cast %18 : vector<128xf32> to vector<1x128xf32>
    %cst_13 = arith.constant 1.250000e-01 : f32
    %20 = vector.broadcast %cst_13 : f32 to vector<1x128xf32>
    %21 = arith.mulf %19, %20 : vector<1x128xf32>
    %22 = arith.mulf %16, %16 : vector<1x128xf32>
    %23 = arith.subf %21, %22 : vector<1x128xf32>
    %cst_14 = arith.constant 0.000000e+00 : f32
    %24 = vector.broadcast %cst_14 : f32 to vector<1x128xf32>
    %25 = arith.maximumf %23, %24 : vector<1x128xf32>
    %cst_15 = arith.constant 9.99999974E-6 : f32
    %26 = vector.broadcast %cst_15 : f32 to vector<1x128xf32>
    %27 = arith.addf %25, %26 : vector<1x128xf32>
    %28 = math.rsqrt %27 : vector<1x128xf32>
    %29 = arith.mulf %2, %28 : vector<1x128xf32>
    %30 = arith.mulf %16, %29 : vector<1x128xf32>
    %31 = arith.subf %3, %30 : vector<1x128xf32>
    %32 = vector.broadcast %29 : vector<1x128xf32> to vector<8x128xf32>
    %33 = arith.mulf %12, %32 : vector<8x128xf32>
    %34 = vector.broadcast %31 : vector<1x128xf32> to vector<8x128xf32>
    %35 = arith.addf %33, %34 : vector<8x128xf32>
    %c0_16 = arith.constant 0 : index
    %c0_17 = arith.constant 0 : index
    %36 = vector.load %arg4[%c0_16, %c0_17] : memref<8x128xf32, #tpu.memory_space<vmem>>, vector<8x128xf32>
    tpu.vector_store %arg4[%c0_16, %c0_17], %35 {strides = array<i32>} : memref<8x128xf32, #tpu.memory_space<vmem>>, vector<8x128xf32>,
    return
  }
  func.func @transform_0(%arg0: i32) -> (i32, i32) {
    %c0_i32 = arith.constant 0 : i32
    %c0_i32_0 = arith.constant 0 : i32
    %c0_i32_1 = arith.constant 0 : i32
    return %c0_i32, %c0_i32_0 : i32, i32
  }
  func.func @transform_1(%arg0: i32) -> (i32, i32) {
    %c0_i32 = arith.constant 0 : i32
    %c0_i32_0 = arith.constant 0 : i32
    return %c0_i32, %arg0 : i32, i32
  }
  func.func @transform_2(%arg0: i32) -> (i32, i32) {
    %c0_i32 = arith.constant 0 : i32
    %c0_i32_0 = arith.constant 0 : i32
    return %c0_i32, %arg0 : i32, i32
  }
  func.func @transform_3(%arg0: i32) -> (i32, i32) {
    %c0_i32 = arith.constant 0 : i32
    %c0_i32_0 = arith.constant 0 : i32
    return %c0_i32, %arg0 : i32, i32
  }
}

</mosaic_0001>

<llo_original>
// kernel: dense_vanilla_block.1
$region0: #{dense_vanilla_block.1}
  #allocation0 [shape = 'u32[]', space=smem, size = 0x4, offset = 0x4, fixed_abs, tag = 'smem constant byte address 0x4 - core index']
  #allocation1 [shape = 'u32[144,128]{1,0:T(1,128)}', space=vmem, size = 0x12000, scoped, tag = 'internal scratch']
  #allocation2 [shape = 'f32[8,128]{1,0:T(8,128)}', space=vmem, size = 0x1000, scoped, tag = 'scratch operand']
  %s0 = inlined_call_operand.vmem [shape: bf16[8,32], index: 0, kind: input, shape index: {}]
  %s1 = inlined_call_operand.hbm [shape: bf16[32,256], index: 1, kind: input, shape index: {}]
  %s2 = inlined_call_operand.vmem [shape: f32[3,256], index: 2, kind: input, shape index: {}]
  %s3 = inlined_call_operand.hbm [shape: f32[8,256], index: 3, kind: output, shape index: {}]
  %s4 = sld [smem:[#allocation0]]
  $region49: #{dense_vanilla_block.1} parent=0
    _
  %s6 = ssub.s32 1, %s4
  %s7 = scalar_select 0, %s6, %s4
  $region1: #{dense_vanilla_block.1} parent=0
    #allocation3 [shape = 'u8[16384]{0}', space=vmem, size = 0x4000, scoped, tag = 'input window, operand 1']
    #allocation4 [shape = 's32[2]{0}', space=sflag, size = 0x8, scoped, tag = 'scoped memory for dense_vanilla_block.1']
    #allocation5 [shape = 's32[2]{0}', space=sflag, size = 0x8, scoped, tag = 'scoped memory for dense_vanilla_block.1']
    #allocation6 [shape = 'u8[8192]{0}', space=vmem, size = 0x2000, scoped, tag = 'output window, operand 0']
    %8 = vsyncpa [#allocation4], 0
    %s9 = scalar_lea.sflag [#allocation4], 1
    %10 = vsyncpa %s9, 0
    %11 = vsyncpa [#allocation5], 0
    %s12 = scalar_lea.sflag [#allocation5], 1
    %13 = vsyncpa %s12, 0
    loop: start=0, step=1, limit=4
    $region2: #{dense_vanilla_block.1} parent=1 // loop_pre_header
      _
    $region3: #{dense_vanilla_block.1} parent=1 // loop_header
      %s15 = sphi 0, %s19
      %p16 = scmp.ge.s32.totalorder %s15, 4
      %s23 = sphi 0, %s23
      %s25 = sphi 0, %s23
      %s26 = sphi 0, %s25
      %s40 = sphi 0, %s26
      %s46 = sphi 0, %s48
      %s49 = sphi 0, %s46
      %s50 = sphi 0, %s49
      %s66 = sphi 0, %s50
      %s72 = sphi 0, %s74
      %s75 = sphi 0, %s72
      %s76 = sphi 0, %s75
      %s92 = sphi 0, %s76
      %s98 = sphi 0, %s100
      %s101 = sphi 0, %s98
      %s102 = sphi 0, %s101
      %s118 = sphi 0, %s102
    $region4: #{dense_vanilla_block.1} parent=1 // loop_header_branch
      %18 = sbr.rel (%p16) target = $region8
    $region5: #{dense_vanilla_block.1} parent=1 // loop_body
      %s20 = ssub.s32 %s15, 1
      %s21 = ssub.s32 %s15, 2
      %s22 = sadd.s32 %s15, 1
      %s24 = sadd.s32 %s23, 1
      %p27 = scmp.eq.s32.totalorder %s15, 1
      %p28 = scmp.ne.s32.totalorder %s23, %s25
      %p29 = scmp.eq.s32.totalorder %s15, 0
      %p30 = por %p28, %p29
      %p31 = scmp.ne.s32.totalorder %s23, %s25
      %p32 = scmp.eq.s32.totalorder %s20, 1
      %p33 = por %p31, %p32
      %p34 = scmp.ne.s32.totalorder %s25, %s26
      %p35 = scmp.eq.s32.totalorder %s20, 0
      %p36 = por %p34, %p35
      %p37 = scmp.ne.s32.totalorder %s25, %s26
      %p38 = scmp.eq.s32.totalorder %s21, 1
      %p39 = por %p37, %p38
      %p41 = scmp.ne.s32.totalorder %s26, %s40
      %p42 = scmp.eq.s32.totalorder %s21, 0
      %p43 = por %p41, %p42
      %s44 = ssub.s32 %s15, %s22
      %p45 = scmp.eq.s32.totalorder %s44, 0
      %s47 = sadd.s32 %s46, 1
      %s48 = scalar_select %p45, %s46, %s47
      %p51 = pneg %p45
      %p52 = scmp.eq.s32.totalorder %s15, 1
      %p53 = por %p51, %p52
      %p54 = scmp.ne.s32.totalorder %s46, %s49
      %p55 = scmp.eq.s32.totalorder %s15, 0
      %p56 = por %p54, %p55
      %p57 = scmp.ne.s32.totalorder %s46, %s49
      %p58 = scmp.eq.s32.totalorder %s20, 1
      %p59 = por %p57, %p58
      %p60 = scmp.ne.s32.totalorder %s49, %s50
      %p61 = scmp.eq.s32.totalorder %s20, 0
      %p62 = por %p60, %p61
      %p63 = scmp.ne.s32.totalorder %s49, %s50
      %p64 = scmp.eq.s32.totalorder %s21, 1
      %p65 = por %p63, %p64
      %p67 = scmp.ne.s32.totalorder %s50, %s66
      %p68 = scmp.eq.s32.totalorder %s21, 0
      %p69 = por %p67, %p68
      %s70 = ssub.s32 %s15, %s22
      %p71 = scmp.eq.s32.totalorder %s70, 0
      %s73 = sadd.s32 %s72, 1
      %s74 = scalar_select %p71, %s72, %s73
      %p77 = pneg %p71
      %p78 = scmp.eq.s32.totalorder %s15, 1
      %p79 = por %p77, %p78
      %p80 = scmp.ne.s32.totalorder %s72, %s75
      %p81 = scmp.eq.s32.totalorder %s15, 0
      %p82 = por %p80, %p81
      %p83 = scmp.ne.s32.totalorder %s72, %s75
      %p84 = scmp.eq.s32.totalorder %s20, 1
      %p85 = por %p83, %p84
      %p86 = scmp.ne.s32.totalorder %s75, %s76
      %p87 = scmp.eq.s32.totalorder %s20, 0
      %p88 = por %p86, %p87
      %p89 = scmp.ne.s32.totalorder %s75, %s76
      %p90 = scmp.eq.s32.totalorder %s21, 1
      %p91 = por %p89, %p90
      %p93 = scmp.ne.s32.totalorder %s76, %s92
      %p94 = scmp.eq.s32.totalorder %s21, 0
      %p95 = por %p93, %p94
      %s96 = ssub.s32 %s15, %s22
      %p97 = scmp.eq.s32.totalorder %s96, 0
      %s99 = sadd.s32 %s98, 1
      %s100 = scalar_select %p97, %s98, %s99
      %p103 = pneg %p97
      %p104 = scmp.eq.s32.totalorder %s15, 1
      %p105 = por %p103, %p104
      %p106 = scmp.ne.s32.totalorder %s98, %s101
      %p107 = scmp.eq.s32.totalorder %s15, 0
      %p108 = por %p106, %p107
      %p109 = scmp.ne.s32.totalorder %s98, %s101
      %p110 = scmp.eq.s32.totalorder %s20, 1
      %p111 = por %p109, %p110
      %p112 = scmp.ne.s32.totalorder %s101, %s102
      %p113 = scmp.eq.s32.totalorder %s20, 0
      %p114 = por %p112, %p113
      %p115 = scmp.ne.s32.totalorder %s101, %s102
      %p116 = scmp.eq.s32.totalorder %s21, 1
      %p117 = por %p115, %p116
      %p119 = scmp.ne.s32.totalorder %s102, %s118
      %p120 = scmp.eq.s32.totalorder %s21, 0
      %p121 = por %p119, %p120
      %p122 = scmp.le.s32.totalorder 1, %s15
      %p123 = scmp.lt.s32.totalorder %s15, 3
      %p124 = pnand %p122, %p123
      %p125 = pneg %p124
      // Predicated region
      $region9: #{dense_vanilla_block.1} parent=5 // pred_check
        _
      $region10: #{dense_vanilla_block.1} parent=5 // pred_check_branch
        %127 = sbr.rel (%p124) target = $region12
      $region11: #{dense_vanilla_block.1} parent=5 // pred_region
        %s128 = ssub.s32 %s15, 1
        // Predicated region
        $region13: #{dense_vanilla_block.1} parent=11 // pred_check
          %p129 = pneg %p36
        $region14: #{dense_vanilla_block.1} parent=11 // pred_check_branch
          %131 = sbr.rel (%p129) target = $region16
        $region15: #{dense_vanilla_block.1} parent=11 // pred_region
          _
        $region16: #{dense_vanilla_block.1} parent=11 // pred_fallthru
          _
      $region12: #{dense_vanilla_block.1} parent=5 // pred_fallthru
        _
      %p132 = scmp.lt.s32.totalorder %s15, 2
      // Predicated region
      $region17: #{dense_vanilla_block.1} parent=5 // pred_check
        %p133 = pneg %p132
      $region18: #{dense_vanilla_block.1} parent=5 // pred_check_branch
        %135 = sbr.rel (%p133) target = $region20
      $region19: #{dense_vanilla_block.1} parent=5 // pred_region
        // Predicated region
        $region21: #{dense_vanilla_block.1} parent=19 // pred_check
          %p136 = pneg %p56
        $region22: #{dense_vanilla_block.1} parent=19 // pred_check_branch
          %138 = sbr.rel (%p136) target = $region24
        $region23: #{dense_vanilla_block.1} parent=19 // pred_region
          %s139 = sand.u32 %s46, 1
          %s140 = scalar_lea.sflag [#allocation4], %s139
          %s141 = sand.u32 %s46, 1
          %s142 = smul.addr %s141, 16
          %s143 = scalar_lea.vmem [#allocation3], %s142
          %s145 = ssub.s32 256, 256
          %146 = vsyncadd %s140, %s145
          %s147 = smul.addr %s15, 64
          %s148 = scalar_lea.hbm %s1, %s147
          %s149 = sshll.u32 %s143, 4
          %s150 = int_to_ptr.vmem [resolvable:$true] %s149
          %155 = dma.hbm_to_vmem [thread:$0]  %s148, 256, %s150, %s140, 128, 64, 4
        $region24: #{dense_vanilla_block.1} parent=19 // pred_fallthru
          _
        // Predicated region
        $region25: #{dense_vanilla_block.1} parent=19 // pred_check
          %p156 = pneg %p82
        $region26: #{dense_vanilla_block.1} parent=19 // pred_check_branch
          %158 = sbr.rel (%p156) target = $region28
        $region27: #{dense_vanilla_block.1} parent=19 // pred_region
          %p159 = scmp.lt.s32.totalorder %s15, 1
          %s160 = scalar_select %p159, %s15, 1
          %s161 = smul.addr %s160, 4
          %s162 = scalar_lea.vmem %s2, %s161
        $region28: #{dense_vanilla_block.1} parent=19 // pred_fallthru
          _
      $region20: #{dense_vanilla_block.1} parent=5 // pred_fallthru
        _
      %p163 = scmp.le.s32.totalorder 1, %s15
      %p164 = scmp.lt.s32.totalorder %s15, 3
      %p165 = pnand %p163, %p164
      %p166 = pneg %p165
      // Predicated region
      $region29: #{dense_vanilla_block.1} parent=5 // pred_check
        _
      $region30: #{dense_vanilla_block.1} parent=5 // pred_check_branch
        %168 = sbr.rel (%p165) target = $region32
      $region31: #{dense_vanilla_block.1} parent=5 // pred_region
        %s169 = ssub.s32 %s15, 1
        %s170 = sand.u32 %s49, 1
        %s171 = scalar_lea.sflag [#allocation4], %s170
        %s172 = sand.u32 %s49, 1
        %s173 = smul.addr %s172, 16
        %s174 = scalar_lea.vmem [#allocation3], %s173
        // Predicated region
        $region33: #{dense_vanilla_block.1} parent=31 // pred_check
          %p175 = pneg %p62
        $region34: #{dense_vanilla_block.1} parent=31 // pred_check_branch
          %177 = sbr.rel (%p175) target = $region36
        $region35: #{dense_vanilla_block.1} parent=31 // pred_region
          %178 = dma.done %s171, 256
        $region36: #{dense_vanilla_block.1} parent=31 // pred_fallthru
          _
        %p179 = pneg %p36
        %p180 = pneg %p33
        %s181 = sand.u32 %s49, 1
        %s182 = scalar_lea.sflag [#allocation4], %s181
        %s183 = sand.u32 %s49, 1
        %s184 = smul.addr %s183, 16
        %s185 = scalar_lea.vmem [#allocation3], %s184
        %p186 = pneg %p62
        %p187 = pneg %p59
        %p188 = scmp.lt.s32.totalorder %s20, 1
        %s189 = scalar_select %p188, %s20, 1
        %s190 = smul.addr %s189, 4
        %s191 = scalar_lea.vmem %s2, %s190
        %p192 = pneg %p88
        %p193 = pneg %p85
        %p194 = pneg %p114
        %p195 = pneg %p111
        %s196 = sand.u32 %s101, 1
        %s197 = scalar_lea.sflag [#allocation5], %s196
        %s198 = sand.u32 %s101, 1
        %s199 = smul.addr %s198, 8
        %s200 = scalar_lea.vmem [#allocation6], %s199
        %p201 = scmp.lt.s32.totalorder %s20, 1
        %s202 = scalar_select %p201, %s20, 1
        %s203 = smul.addr %s202, 4
        %s204 = scalar_lea.vmem %s2, %s203
        %v206 = vld [vmem:[%s204] sm:$0x7]
        %v207 = vld [vmem:[%s0] sm:$0xf]
        %v208 = vld [vmem:[%s174] sm:$0xf]
        %v209 = vld [vmem:[%s174 + $0x4] sm:$0xf]
        %v210 = vld [vmem:[%s174 + $0x8] sm:$0xf]
        %v211 = vld [vmem:[%s174 + $0xc] sm:$0xf]
        %v212 = vlaneseq
        %v213 = vshrl.u32 %v212, 7
        %v214 = vsub.s32 0, %v213
        %v215 = vrot.slane %v206, %v214
        %v220 = vunpack.c.l.b16 %v208
        %v221 = vunpack.c.l.b16 %v209
        %v222 = vunpack.c.l.b16 %v210
        %v223 = vunpack.c.l.b16 %v211
        %v224 = vpack.c.b16 %v221, %v220
        %v225 = vpack.c.b16 %v223, %v222
        %vm228 = vcmask 261120
        %v230 = vsel %vm228, %v207, 0
        %232 = vmatprep.subr.bf16.mxu0 0
        %233 = vmatpush1.bf16.msra.mxu0 %v224
        %234 = vmatprep.subr.bf16.mxu0 0
        %235 = vmatpush1.bf16.msra.mxu0 %v225
        %236 = vmatprep.subr.bf16.mxu0 0
        %237 = vmatpush1.bf16.msra.mxu0 0
        %238 = vmatprep.subr.bf16.mxu0 0
        %239 = vmatpush1.bf16.msra.mxu0 0
        %240 = vmatprep.subr.bf16.mxu0 0
        %241 = vmatpush1.bf16.msra.mxu0 0
        %242 = vmatprep.subr.bf16.mxu0 0
        %243 = vmatpush1.bf16.msra.mxu0 0
        %244 = vmatprep.subr.bf16.mxu0 0
        %245 = vmatpush1.bf16.msra.mxu0 0
        %246 = vmatprep.subr.bf16.mxu0 0
        %247 = vmatpush1.bf16.msra.mxu0 0
        %248 = vmatprep.subr.bf16.mxu0 0
        %249 = vmatpush1.bf16.msra.mxu0 0
        %250 = vmatprep.subr.bf16.mxu0 0
        %251 = vmatpush1.bf16.msra.mxu0 0
        %252 = vmatprep.subr.bf16.mxu0 0
        %253 = vmatpush1.bf16.msra.mxu0 0
        %254 = vmatprep.subr.bf16.mxu0 0
        %255 = vmatpush1.bf16.msra.mxu0 0
        %256 = vmatprep.subr.bf16.mxu0 0
        %257 = vmatpush1.bf16.msra.mxu0 0
        %258 = vmatprep.subr.bf16.mxu0 0
        %259 = vmatpush1.bf16.msra.mxu0 0
        %260 = vmatprep.subr.bf16.mxu0 0
        %261 = vmatpush1.bf16.msra.mxu0 0
        %262 = vmatprep.subr.bf16.mxu0 0
        %263 = vmatpush1.bf16.msra.mxu0 0
        %264 = vmatprep.mubr.bf16.mxu0 0
        %265 = vmatmul.mubr.bf16.gmra.mrb[0].mxu0 %v230
        %v266 = vpop.f32.mrb[0].mxu0
        %v267 = vadd.f32 %v215, %v266
        %v268 = vpop.f32.mrb[0].mxu0
        %v269 = vpop.f32.mrb[0].mxu0
        %v270 = vpop.f32.mrb[0].mxu0
        %271 = vdwg.mxu0
        %v272 = vmax.f32 %v267, 0.0
        %273 = vst [vmem:[#allocation2] sm:$0xff] %v272
        %v274 = vld [vmem:[#allocation2] sm:$0xff]
        %v275 = vrot.slane %v274, 4
        %v276 = vadd.f32 %v274, %v275
        %v277 = vrot.slane %v276, 2
        %v278 = vadd.f32 %v276, %v277
        %v279 = vrot.slane %v278, 1
        %v280 = vadd.f32 %v278, %v279
        %v281 = vmul.f32 %v280, 0.125
        %v282 = vmul.f32 %v274, %v274
        %v283 = vrot.slane %v282, 4
        %v284 = vadd.f32 %v282, %v283
        %v285 = vrot.slane %v284, 2
        %v286 = vadd.f32 %v284, %v285
        %v287 = vrot.slane %v286, 1
        %v288 = vadd.f32 %v286, %v287
        %v289 = vmul.f32 %v288, 0.125
        %v290 = vmul.f32 %v281, %v281
        %v291 = vsub.f32 %v289, %v290
        %v292 = vmax.f32 %v291, 0.0
        %v293 = vadd.f32 %v292, 1e-05
        %v294 = vrsqrt.pop %v293
        %v295 = vmul.f32 %v206, %v294
        %v296 = vmul.f32 %v281, %v295
        %v298 = vrot.slane %v296, 7
        %v300 = vsub.f32 %v206, %v298
        %v301 = vlaneseq
        %v302 = vshrl.u32 %v301, 7
        %v303 = vsub.s32 1, %v302
        %v304 = vrot.slane %v295, %v303
        %v305 = vmul.f32 %v274, %v304
        %v306 = vlaneseq
        %v307 = vshrl.u32 %v306, 7
        %v308 = vsub.s32 2, %v307
        %v309 = vrot.slane %v300, %v308
        %v310 = vadd.f32 %v305, %v309
        %311 = vst [vmem:[%s200] sm:$0xff] %v310
        %s312 = sand.u32 %s101, 1
        %s313 = scalar_lea.sflag [#allocation5], %s312
        %s314 = sand.u32 %s101, 1
        %s315 = smul.addr %s314, 8
        %s316 = scalar_lea.vmem [#allocation6], %s315
        // Predicated region
        $region37: #{dense_vanilla_block.1} parent=31 // pred_check
          %p317 = pneg %p111
        $region38: #{dense_vanilla_block.1} parent=31 // pred_check_branch
          %319 = sbr.rel (%p317) target = $region40
        $region39: #{dense_vanilla_block.1} parent=31 // pred_region
          %s321 = ssub.s32 128, 128
          %322 = vsyncadd %s313, %s321
          %s323 = smul.addr %s20, 128
          %s324 = scalar_lea.hbm %s3, %s323
          %s326 = sshll.u32 %s316, 4
          %s327 = int_to_ptr.vmem [resolvable:$true] %s326
          %329 = dma.vmem_to_hbm [thread:$0]  %s327, 128, %s324, %s313
        $region40: #{dense_vanilla_block.1} parent=31 // pred_fallthru
          _
      $region32: #{dense_vanilla_block.1} parent=5 // pred_fallthru
        _
      %p330 = scmp.le.s32.totalorder 2, %s15
      // Predicated region
      $region41: #{dense_vanilla_block.1} parent=5 // pred_check
        %p331 = pneg %p330
      $region42: #{dense_vanilla_block.1} parent=5 // pred_check_branch
        %333 = sbr.rel (%p331) target = $region44
      $region43: #{dense_vanilla_block.1} parent=5 // pred_region
        %s334 = ssub.s32 %s15, 2
        // Predicated region
        $region45: #{dense_vanilla_block.1} parent=43 // pred_check
          %p335 = pneg %p117
        $region46: #{dense_vanilla_block.1} parent=43 // pred_check_branch
          %337 = sbr.rel (%p335) target = $region48
        $region47: #{dense_vanilla_block.1} parent=43 // pred_region
          %s338 = sand.u32 %s102, 1
          %s339 = scalar_lea.sflag [#allocation5], %s338
          %s340 = sand.u32 %s102, 1
          %s341 = smul.addr %s340, 8
          %s342 = scalar_lea.vmem [#allocation6], %s341
          %343 = dma.done %s339, 128
        $region48: #{dense_vanilla_block.1} parent=43 // pred_fallthru
          _
      $region44: #{dense_vanilla_block.1} parent=5 // pred_fallthru
        _
    $region6: #{dense_vanilla_block.1} parent=1 // loop_footer
      %s19 = sadd.s32 1, %s15
    $region7: #{dense_vanilla_block.1} parent=1 // loop_footer_branch
      %14 = sbr.rel target = $region3
    $region8: #{dense_vanilla_block.1} parent=1 // loop_exit
      _
    %344 = vsyncpa [#allocation4], 1
    %s345 = scalar_lea.sflag [#allocation4], 1
    %346 = vsyncpa %s345, 1
    %347 = vsyncpa [#allocation5], 1
    %s348 = scalar_lea.sflag [#allocation5], 1
    %349 = vsyncpa %s348, 1

</llo_original>
